<compile_context>
chip_gen: v7x
topology: tpu7x:2x2x1
jax: 0.10.0
libtpu: 0.0.40
codegen_flags: <defaults>
</compile_context>

<pallas_src>
import functools
import math

import jax
import jax.numpy as jnp
from jax import lax
from jax.experimental import pallas as pl
from jax.experimental.pallas import tpu as pltpu

_LANE = 128
_MIB = 1 << 20


# ----------------------------------------------------------------------------
# Tiling / VMEM helpers
# ----------------------------------------------------------------------------
def _pick_tile(dim, candidates):
    """Largest candidate (or 128-multiple <= max candidate) evenly dividing dim.

    Falls back to `dim` itself only when no 128-aligned divisor exists (tiny or
    ragged shapes), keeping the VMEM footprint predictable at production sizes.
    """
    for c in candidates:
        if dim >= c and dim % c == 0:
            return c
    hi = min(max(candidates), (dim // _LANE) * _LANE)
    for c in range(hi, 0, -_LANE):
        if dim % c == 0:
            return c
    # TODO(synk): masked epilogue (pl.cdiv grid) for dims with no 128-aligned divisor.
    return dim


def _vmem_limit(nbytes):
    """Scoped-VMEM limit: footprint + headroom, clamped to v7x's 64 MiB/TC."""
    return int(min(max(nbytes * 1.3 + 2 * _MIB, 16 * _MIB), 64 * _MIB))


def _default_exp_dtype(compute_dtype):
    """bf16 exp (doubles EUP throughput) only on chips with a bf16 EUP
    (v6e / v7x); f32 exp elsewhere.  Softmax stats stay f32 regardless."""
    if compute_dtype == jnp.bfloat16:
        try:
            kind = jax.devices()[0].device_kind.lower()
        except Exception:  # pragma: no cover - defensive
            kind = ""
        if ("v6" in kind) or ("v7" in kind):
            return jnp.bfloat16
    return jnp.float32


# ----------------------------------------------------------------------------
# Linear layer kernel:  y = x @ W_t + b   (W_t pre-transposed: (d_in, d_out))
# ----------------------------------------------------------------------------
def linear_kernel(x_ref, w_ref, b_ref, o_ref, acc_ref):
    @pl.when(pl.program_id(2) == 0)
    def _init():
        acc_ref[...] = jnp.zeros(acc_ref.shape, acc_ref.dtype)

    acc_ref[...] += jnp.dot(x_ref[...], w_ref[...],
                            preferred_element_type=jnp.float32)

    @pl.when(pl.program_id(2) == pl.num_programs(2) - 1)
    def _store():
        o_ref[...] = (acc_ref[...] + b_ref[...]).astype(o_ref.dtype)


def linear(x, w_t, b, *, out_dtype=None):
    """x: (N, d_in), w_t: (d_in, d_out) pre-transposed, b: (d_out,) -> (N, d_out)."""
    N, d_in = x.shape
    d_out = w_t.shape[1]
    if out_dtype is None:
        out_dtype = x.dtype

    # 512/256 first: v6e/v7x MXUs are 256x256 (128 only fully loads v5e's
    # 128x128 MXU); tm=512 halves weight re-streaming from HBM for large N.
    tm = _pick_tile(N, (512, 256, 128))
    tn = _pick_tile(d_out, (512, 256, 128))
    tk = _pick_tile(d_in, (512, 256, 128))

    in_b = jnp.dtype(x.dtype).itemsize
    w_b = jnp.dtype(w_t.dtype).itemsize
    out_b = jnp.dtype(out_dtype).itemsize
    footprint = (2 * tm * tk * in_b          # x double-buffer
                 + 2 * tk * tn * w_b         # w double-buffer
                 + 2 * tn * 4                # bias
                 + 2 * tm * tn * out_b       # output double-buffer
                 + tm * tn * 4)              # f32 accumulator scratch

    return pl.pallas_call(
        linear_kernel,
        out_shape=jax.ShapeDtypeStruct((N, d_out), out_dtype),
        grid=(N // tm, d_out // tn, d_in // tk),
        in_specs=[
            pl.BlockSpec((tm, tk), lambda i, j, k: (i, k)),
            pl.BlockSpec((tk, tn), lambda i, j, k: (k, j)),
            pl.BlockSpec((1, tn), lambda i, j, k: (0, j)),
        ],
        out_specs=pl.BlockSpec((tm, tn), lambda i, j, k: (i, j)),
        scratch_shapes=[pltpu.VMEM((tm, tn), jnp.float32)],
        compiler_params=pltpu.CompilerParams(
            dimension_semantics=("parallel", "parallel", "arbitrary"),
            vmem_limit_bytes=_vmem_limit(footprint)),
    )(x, w_t, b.reshape(1, d_out))


# ----------------------------------------------------------------------------
# Flash-style attention kernel (online softmax over the kv axis).
#   Q is pre-scaled by 1/sqrt(d_k) (folded into Wq by prepare_params).
#   Heads live as contiguous column groups of the (tile, h*d_k) blocks.
# ----------------------------------------------------------------------------
def attention_kernel(q_ref, k_ref, v_ref, o_ref, m_ref, l_ref, acc_ref,
                     *, h, d_k, exp_dtype):
    ki = pl.program_id(2)

    @pl.when(ki == 0)
    def _init():
        m_ref[...] = jnp.full(m_ref.shape, -jnp.inf, m_ref.dtype)
        l_ref[...] = jnp.zeros(l_ref.shape, l_ref.dtype)
        acc_ref[...] = jnp.zeros(acc_ref.shape, acc_ref.dtype)

    q_all = q_ref[0]                       # (q_tile, h*d_k), already scaled
    k_all = k_ref[0]                       # (kv_tile, h*d_k)
    v_all = v_ref[0]                       # (kv_tile, h*d_k)

    # Static (unrolled) loop over heads: each head is a clean 2-D MXU matmul.
    # TODO(synk): for d_k == 64, batch head PAIRS over an aligned 128-lane slice
    #             to avoid lane-relayout of the odd-head column slices.
    for hd in range(h):
        lo = hd * d_k
        qh = q_all[:, lo:lo + d_k]         # (q_tile, d_k)
        kh = k_all[:, lo:lo + d_k]         # (kv_tile, d_k)
        vh = v_all[:, lo:lo + d_k]         # (kv_tile, d_k)

        # QK^T via dot_general contracting d_k -> no physical transpose of K.
        s = lax.dot_general(qh, kh, (((1,), (1,)), ((), ())),
                            preferred_element_type=jnp.float32)  # (q, kv)

        m_prev = m_ref[hd]                                        # (q_tile, 1)
        m_new = jnp.maximum(m_prev, jnp.max(s, axis=-1, keepdims=True))
        alpha = jnp.exp(m_prev - m_new)
        # exp in bf16 on v6e/v7x (bf16 EUP ~2x throughput); stats stay f32.
        p = jnp.exp((s - m_new).astype(exp_dtype))
        l_ref[hd] = alpha * l_ref[hd] + jnp.sum(
            p.astype(jnp.float32), axis=-1, keepdims=True)
        acc_ref[hd] = alpha * acc_ref[hd] + jnp.dot(
            p.astype(vh.dtype), vh, preferred_element_type=jnp.float32)
        m_ref[hd] = m_new

    @pl.when(ki == pl.num_programs(2) - 1)
    def _finalize():
        # Normalize each head straight into the output block's column range:
        # no (q_tile, d_model) f32 concat temporary at the peak-VMEM point;
        # the (q_tile, d_model) block itself is written back lane-dense.
        for hd in range(h):
            lo = hd * d_k
            inv_l = pl.reciprocal(l_ref[hd], approx=True)   # EUP slot
            o_ref[0, :, lo:lo + d_k] = (acc_ref[hd] * inv_l).astype(o_ref.dtype)


def _attention_tiles(S_q, S_kv, d_model, h, in_bytes, out_bytes):
    """(q_tile, kv_tile, footprint_bytes) fitting a ~40 MiB VMEM budget.

    K/V are re-streamed S_q/q_tile times, so large q_tile raises the kv-loop
    arithmetic intensity (v6e needs ~650 flop/byte to go compute-bound);
    kv_tile prefers 256-multiples for the 256x256 MXUs and is shrunk first when
    the budget is tight (v7x has only 64 MiB of VMEM per TensorCore).
    """
    budget = 40 * _MIB

    def footprint(q_t, kv_t):
        return (2 * q_t * d_model * in_bytes        # Q double-buffer
                + 4 * kv_t * d_model * in_bytes     # K + V double-buffers
                + 2 * q_t * d_model * out_bytes     # output double-buffer
                + q_t * d_model * 4                 # f32 accumulator scratch
                + 2 * h * q_t * 4                   # m / l stats
                + 3 * q_t * kv_t * 4)               # live f32 score temporaries

    for q_t, kv_t in ((512, 512), (512, 256), (256, 512), (256, 256),
                      (512, 128), (256, 128), (128, 256), (128, 128)):
        if S_q % q_t or S_kv % kv_t:
            continue
        fp = footprint(q_t, kv_t)
        if fp <= budget:
            return q_t, kv_t, fp

    # Small / ragged shapes: fall back to 128-aligned divisors or the full axis.
    q_t = _pick_tile(S_q, (512, 256, 128))
    kv_t = _pick_tile(S_kv, (512, 256, 128))
    return q_t, kv_t, footprint(q_t, kv_t)


def scaled_dot_product_attention(q, k, v, h, d_model, *,
                                 q_col=0, k_col=0, v_col=0,
                                 exp_dtype=jnp.float32):
    """q/k/v: (B, S, C) with C = d_model or a packed multiple of it.

    (q_col, k_col, v_col) select which d_model-wide column block of each input
    feeds Q/K/V, so the fused (B, S, 3*d_model) QKV projection is consumed
    directly by the kernel with zero HBM-materialized slices.
    Output: (B, S_q, d_model) head-concatenated — identical to PyTorch's
    x.transpose(1,2).contiguous().view(B, -1, h*d_k).
    """
    B, S_q, _ = q.shape
    S_kv = k.shape[1]
    d_k = d_model // h
    in_bytes = jnp.dtype(q.dtype).itemsize

    q_tile, kv_tile, footprint = _attention_tiles(
        S_q, S_kv, d_model, h, in_bytes, in_bytes)

    # Keep >= 2 "parallel" blocks so both v7x TensorCores get work (B=1 case).
    while (B * (S_q // q_tile) < 2 and q_tile >= 2 * _LANE
           and S_q % (q_tile // 2) == 0):
        q_tile //= 2

    kernel = functools.partial(attention_kernel, h=h, d_k=d_k,
                               exp_dtype=exp_dtype)
    return pl.pallas_call(
        kernel,
        out_shape=jax.ShapeDtypeStruct((B, S_q, d_model), q.dtype),
        grid=(B, S_q // q_tile, S_kv // kv_tile),
        in_specs=[
            pl.BlockSpec((1, q_tile, d_model),
                         lambda b, qi, ki, c=q_col: (b, qi, c)),
            pl.BlockSpec((1, kv_tile, d_model),
                         lambda b, qi, ki, c=k_col: (b, ki, c)),
            pl.BlockSpec((1, kv_tile, d_model),
                         lambda b, qi, ki, c=v_col: (b, ki, c)),
        ],
        out_specs=pl.BlockSpec((1, q_tile, d_model),
                               lambda b, qi, ki: (b, qi, 0)),
        scratch_shapes=[
            pltpu.VMEM((h, q_tile, 1), jnp.float32),     # running max  m
            pltpu.VMEM((h, q_tile, 1), jnp.float32),     # running sum  l
            pltpu.VMEM((h, q_tile, d_k), jnp.float32),   # output accumulator
        ],
        compiler_params=pltpu.CompilerParams(
            dimension_semantics=("parallel", "parallel", "arbitrary"),
            vmem_limit_bytes=_vmem_limit(footprint)),
    )(q, k, v)


# ----------------------------------------------------------------------------
# One-time parameter preprocessing (hoisted out of the per-call forward)
# ----------------------------------------------------------------------------
def prepare_params(params, d_model, h, compute_dtype=jnp.bfloat16):
    """Transpose weights to (d_in, d_out), fold 1/sqrt(d_k) into Wq/bq, build
    the fused QKV weight for the self-attention fast path, cast to compute
    dtype.  bf16 compute is the default on all generations (full-rate MXU,
    half the HBM/VMEM traffic); softmax stats / accumulation stay f32."""
    (wq, bq), (wk, bk), (wv, bv), (wo, bo) = params
    d_k = d_model // h
    scale = 1.0 / math.sqrt(d_k)
    cd = compute_dtype
    wq_t = (wq.T * scale).astype(cd)
    wk_t = wk.T.astype(cd)
    wv_t = wv.T.astype(cd)
    return {
        "h": h, "d_model": d_model, "compute_dtype": cd,
        "wq_t": wq_t, "bq": (bq * scale).astype(jnp.float32),
        "wk_t": wk_t, "bk": bk.astype(jnp.float32),
        "wv_t": wv_t, "bv": bv.astype(jnp.float32),
        "wo_t": wo.T.astype(cd), "bo": bo.astype(jnp.float32),
        # fused QKV (self-attention path); costs ~2x QKV weight storage.
        "w_qkv_t": jnp.concatenate([wq_t, wk_t, wv_t], axis=1),
        "b_qkv": jnp.concatenate([(bq * scale), bk, bv]).astype(jnp.float32),
    }


# ----------------------------------------------------------------------------
# MultiHeadedAttenton forward (wrapper glue in plain JAX)
# ----------------------------------------------------------------------------
def multi_headed_attention(prepared, query, key, value, mask=None):
    """query/key/value: (B, S, d_model) -> (B, S, d_model). Inference mode
    (dropout = identity)."""
    assert mask is None  # TODO(synk): masked_fill(-1e9) mask path not wired in.
    h, d_model, cd = prepared["h"], prepared["d_model"], prepared["compute_dtype"]
    B, S, _ = query.shape
    out_dtype = query.dtype
    exp_dtype = _default_exp_dtype(cd)

    x_q = query.reshape(B * S, d_model).astype(cd)

    # Self-attention fast path: requires the SAME array object for q/k/v and a
    # 128-aligned d_model (so the packed column blocks are lane-aligned).
    fused = (query is key) and (key is value) and (d_model % _LANE == 0)
    if fused:
        # One matmul for Q/K/V; the packed (B, S, 3*d_model) result feeds the
        # attention kernel directly via column-block index_maps (no slices).
        qkv = linear(x_q, prepared["w_qkv_t"], prepared["b_qkv"],
                     out_dtype=cd).reshape(B, S, 3 * d_model)
        x = scaled_dot_product_attention(qkv, qkv, qkv, h, d_model,
                                         q_col=0, k_col=1, v_col=2,
                                         exp_dtype=exp_dtype)
    else:
        x_k = key.reshape(-1, d_model).astype(cd)
        x_v = value.reshape(-1, d_model).astype(cd)
        Q = linear(x_q, prepared["wq_t"], prepared["bq"],
                   out_dtype=cd).reshape(B, S, d_model)
        K = linear(x_k, prepared["wk_t"], prepared["bk"],
                   out_dtype=cd).reshape(B, -1, d_model)
        V = linear(x_v, prepared["wv_t"], prepared["bv"],
                   out_dtype=cd).reshape(B, -1, d_model)
        x = scaled_dot_product_attention(Q, K, V, h, d_model,
                                         exp_dtype=exp_dtype)

    out = linear(x.reshape(B * S, d_model), prepared["wo_t"], prepared["bo"],
                 out_dtype=out_dtype)
    return out.reshape(B, S, d_model)


def init_params(key, d_model):
    """4 x nn.Linear(d_model, d_model) with PyTorch-default uniform init."""
    bound = 1.0 / math.sqrt(d_model)
    params = []
    for i in range(4):
        kw, kb = jax.random.split(jax.random.fold_in(key, i))
        w = jax.random.uniform(kw, (d_model, d_model), jnp.float32, -bound, bound)
        b = jax.random.uniform(kb, (d_model,), jnp.float32, -bound, bound)
        params.append((w, b))
    return params


# ----------------------------------------------------------------------------
# Pure-JAX reference for correctness check
# ----------------------------------------------------------------------------
def reference(params, query, key, value, h):
    B, S, d_model = query.shape
    d_k = d_model // h
    (wq, bq), (wk, bk), (wv, bv), (wo, bo) = params

    def proj(x, w, b):
        y = x @ w.T + b
        return y.reshape(B, S, h, d_k).transpose(0, 2, 1, 3)

    Q, K, V = proj(query, wq, bq), proj(key, wk, bk), proj(value, wv, bv)
    scores = jnp.einsum("bhqd,bhkd->bhqk", Q, K) / math.sqrt(d_k)
    attn = jax.nn.softmax(scores, axis=-1)
    x = jnp.einsum("bhqk,bhkd->bhqd", attn, V)
    x_all = x.transpose(0, 2, 1, 3).reshape(B, S, d_model)
    return x_all @ wo.T + bo


if __name__ == "__main__":
    B, S, d_model, h = 2, 8, 128, 4   # d_k = 32

    root = jax.random.PRNGKey(0)
    k_p, k_q, k_k, k_v = jax.random.split(root, 4)
    params = init_params(k_p, d_model)

    query = jax.random.normal(k_q, (B, S, d_model), jnp.float32)
    key = jax.random.normal(k_k, (B, S, d_model), jnp.float32)
    value = jax.random.normal(k_v, (B, S, d_model), jnp.float32)

    ref_cross = reference(params, query, key, value, h)
    ref_self = reference(params, query, query, query, h)

    # Cross-attention path (separate projections), f32 compute — tight check.
    prep_f32 = prepare_params(params, d_model, h, compute_dtype=jnp.float32)
    out = jax.block_until_ready(
        multi_headed_attention(prep_f32, query, key, value))
    assert out.shape == (B, S, d_model)
    assert jnp.allclose(out, ref_cross, atol=2e-2, rtol=2e-2), \
        "f32 mismatch vs reference"

    # Self-attention fast path: fused QKV consumed via packed column
    # index_maps, bf16 compute (the default).
    prep_bf16 = prepare_params(params, d_model, h)   # compute_dtype = bf16
    out_sa = jax.block_until_ready(
        multi_headed_attention(prep_bf16, query, query, query))
    assert out_sa.shape == (B, S, d_model)
    assert jnp.allclose(out_sa.astype(jnp.float32), ref_self,
                        atol=1e-1, rtol=1e-1), "bf16 mismatch vs reference"

    print("KERNEL_OK")
</pallas_src>

<mosaic_0001>
module attributes {stable_mosaic.version = 11 : i64} {
  func.func @linear_kernel(%arg0: i32, %arg1: i32, %arg2: i32, %arg3: memref<16x128xf32, #tpu.memory_space<vmem>>, %arg4: memref<128x128xf32, #tpu.memory_space<vmem>>, %arg5: memref<1x128xf32, #tpu.memory_space<vmem>>, %arg6: memref<16x128xf32, #tpu.memory_space<vmem>>, %arg7: memref<16x128xf32, #tpu.memory_space<vmem>>) attributes {dimension_semantics = [#tpu.dimension_semantics<parallel>, #tpu.dimension_semantics<parallel>, #tpu.dimension_semantics<arbitrary>], iteration_bounds = array<i64: 1, 1, 1>, scalar_prefetch = 0 : i64, scratch_operands = 1 : i64, tpu.core_type = #tpu.core_type<tc>, window_params = [{transform_indices = @transform_0, window_bounds = array<i64: 16, 128>}, {transform_indices = @transform_1, window_bounds = array<i64: 128, 128>}, {transform_indices = @transform_2, window_bounds = array<i64: 1, 128>}, {transform_indices = @transform_3, window_bounds = array<i64: 16, 128>}]} {
    %c0_i32 = arith.constant 0 : i32
    %0 = arith.cmpi eq, %arg2, %c0_i32 : i32
    %1 = arith.extui %0 : i1 to i32
    %c0_i32_0 = arith.constant 0 : i32
    %2 = arith.cmpi ne, %1, %c0_i32_0 : i32
    scf.if %2 {
      %cst_10 = arith.constant 0.000000e+00 : f32
      %12 = vector.broadcast %cst_10 : f32 to vector<16x128xf32>
      %c0_11 = arith.constant 0 : index
      %c0_12 = arith.constant 0 : index
      %13 = vector.load %arg7[%c0_11, %c0_12] : memref<16x128xf32, #tpu.memory_space<vmem>>, vector<16x128xf32>
      tpu.vector_store %arg7[%c0_11, %c0_12], %12 {strides = array<i32>} : memref<16x128xf32, #tpu.memory_space<vmem>>, vector<16x128xf32>,
    } else {
    }
    %c0 = arith.constant 0 : index
    %c0_1 = arith.constant 0 : index
    %3 = vector.load %arg7[%c0, %c0_1] : memref<16x128xf32, #tpu.memory_space<vmem>>, vector<16x128xf32>
    %c0_2 = arith.constant 0 : index
    %c0_3 = arith.constant 0 : index
    %4 = vector.load %arg3[%c0_2, %c0_3] : memref<16x128xf32, #tpu.memory_space<vmem>>, vector<16x128xf32>
    %c0_4 = arith.constant 0 : index
    %c0_5 = arith.constant 0 : index
    %5 = vector.load %arg4[%c0_4, %c0_5] : memref<128x128xf32, #tpu.memory_space<vmem>>, vector<128x128xf32>
    %cst = arith.constant dense<0.000000e+00> : vector<16x128xf32>
    %6 = tpu.matmul %4, %5, %cst {dimension_numbers = #tpu.dot_dimension_numbers<[1], [0], [0], [1], [0, 0, 1, 1], [], []>} : vector<16x128xf32>, vector<128x128xf32>, vector<16x128xf32> -> vector<16x128xf32>
    %7 = arith.addf %3, %6 : vector<16x128xf32>
    %c0_6 = arith.constant 0 : index
    %c0_7 = arith.constant 0 : index
    %8 = vector.load %arg7[%c0_6, %c0_7] : memref<16x128xf32, #tpu.memory_space<vmem>>, vector<16x128xf32>
    tpu.vector_store %arg7[%c0_6, %c0_7], %7 {strides = array<i32>} : memref<16x128xf32, #tpu.memory_space<vmem>>, vector<16x128xf32>,
    %c0_i32_8 = arith.constant 0 : i32
    %9 = arith.cmpi eq, %arg2, %c0_i32_8 : i32
    %10 = arith.extui %9 : i1 to i32
    %c0_i32_9 = arith.constant 0 : i32
    %11 = arith.cmpi ne, %10, %c0_i32_9 : i32
    scf.if %11 {
      %c0_10 = arith.constant 0 : index
      %c0_11 = arith.constant 0 : index
      %12 = vector.load %arg7[%c0_10, %c0_11] : memref<16x128xf32, #tpu.memory_space<vmem>>, vector<16x128xf32>
      %c0_12 = arith.constant 0 : index
      %c0_13 = arith.constant 0 : index
      %13 = vector.load %arg5[%c0_12, %c0_13] : memref<1x128xf32, #tpu.memory_space<vmem>>, vector<1x128xf32>
      %14 = vector.broadcast %13 : vector<1x128xf32> to vector<16x128xf32>
      %15 = arith.addf %12, %14 : vector<16x128xf32>
      %c0_14 = arith.constant 0 : index
      %c0_15 = arith.constant 0 : index
      %16 = vector.load %arg6[%c0_14, %c0_15] : memref<16x128xf32, #tpu.memory_space<vmem>>, vector<16x128xf32>
      tpu.vector_store %arg6[%c0_14, %c0_15], %15 {strides = array<i32>} : memref<16x128xf32, #tpu.memory_space<vmem>>, vector<16x128xf32>,
    } else {
    }
    return
  }
  func.func @transform_0(%arg0: i32, %arg1: i32, %arg2: i32) -> (i32, i32) {
    %c0_i32 = arith.constant 0 : i32
    return %arg0, %arg2 : i32, i32
  }
  func.func @transform_1(%arg0: i32, %arg1: i32, %arg2: i32) -> (i32, i32) {
    %c0_i32 = arith.constant 0 : i32
    return %arg2, %arg1 : i32, i32
  }
  func.func @transform_2(%arg0: i32, %arg1: i32, %arg2: i32) -> (i32, i32) {
    %c0_i32 = arith.constant 0 : i32
    %c0_i32_0 = arith.constant 0 : i32
    return %c0_i32, %arg1 : i32, i32
  }
  func.func @transform_3(%arg0: i32, %arg1: i32, %arg2: i32) -> (i32, i32) {
    %c0_i32 = arith.constant 0 : i32
    return %arg0, %arg1 : i32, i32
  }
}

</mosaic_0001>

<llo_original>
// kernel: tpu_custom_call.1
$region0: #{tpu_custom_call.1}
  #allocation0 [shape = 'u32[]', space=smem, size = 0x4, offset = 0x4, fixed_abs, tag = 'smem constant byte address 0x4 - core index']
  #allocation1 [shape = 'u32[144,128]{1,0:T(1,128)}', space=vmem, size = 0x12000, scoped, tag = 'internal scratch']
  #allocation2 [shape = 'f32[16,128]{1,0:T(8,128)}', space=vmem, size = 0x2000, scoped, tag = 'scratch operand']
  %s0 = inlined_call_operand.hbm [shape: f32[16,128], index: 0, kind: input, shape index: {}]
  %s1 = inlined_call_operand.hbm [shape: f32[128,128], index: 1, kind: input, shape index: {}]
  %s2 = inlined_call_operand.vmem [shape: f32[1,128], index: 2, kind: input, shape index: {}]
  %s3 = inlined_call_operand.hbm [shape: f32[16,128], index: 3, kind: output, shape index: {}]
  %s4 = sld [smem:[#allocation0]]
  $region38: #{tpu_custom_call.1} parent=0
    _
  %s6 = ssub.s32 1, %s4
  %s7 = scalar_select 0, %s6, %s4
  $region1: #{tpu_custom_call.1} parent=0
    #allocation3 [shape = 'u8[8192]{0}', space=vmem, size = 0x2000, scoped, tag = 'input window, operand 0, single buffered']
    #allocation4 [shape = 's32[1]{0}', space=sflag, size = 0x4, scoped, tag = 'scoped memory for tpu_custom_call.1']
    #allocation5 [shape = 's32[1]{0}', space=sflag, size = 0x4, scoped, tag = 'scoped memory for tpu_custom_call.1']
    #allocation6 [shape = 'u8[65536]{0}', space=vmem, size = 0x10000, scoped, tag = 'input window, operand 1, single buffered']
    #allocation7 [shape = 's32[1]{0}', space=sflag, size = 0x4, scoped, tag = 'scoped memory for tpu_custom_call.1']
    #allocation8 [shape = 'u8[8192]{0}', space=vmem, size = 0x2000, scoped, tag = 'output window, operand 0, single buffered']
    %8 = vsyncpa [#allocation4], 0
    %9 = vsyncpa [#allocation7], 0
    %10 = vsyncpa [#allocation5], 0
    // Predicated region
    $region2: #{tpu_custom_call.1} parent=1 // pred_check
      _
    $region3: #{tpu_custom_call.1} parent=1 // pred_check_branch
      %12 = sbr.rel (0) target = $region5
    $region4: #{tpu_custom_call.1} parent=1 // pred_region
      %s14 = ssub.s32 256, 256
      %15 = vsyncadd [#allocation4], %s14
      %s16 = sshll.u32 [#allocation3], 4
      %s17 = int_to_ptr.vmem [resolvable:$true] %s16
      %22 = dma.hbm_to_vmem [thread:$0]  %s0, 256, %s17, [#allocation4], 128, 128, 8
    $region5: #{tpu_custom_call.1} parent=1 // pred_fallthru
      _
    // Predicated region
    $region6: #{tpu_custom_call.1} parent=1 // pred_check
      _
    $region7: #{tpu_custom_call.1} parent=1 // pred_check_branch
      %24 = sbr.rel (0) target = $region9
    $region8: #{tpu_custom_call.1} parent=1 // pred_region
      %s26 = ssub.s32 2048, 2048
      %27 = vsyncadd [#allocation7], %s26
      %s28 = sshll.u32 [#allocation6], 4
      %s29 = int_to_ptr.vmem [resolvable:$true] %s28
      %34 = dma.hbm_to_vmem [thread:$0]  %s1, 2048, %s29, [#allocation7], 128, 128, 8
    $region9: #{tpu_custom_call.1} parent=1 // pred_fallthru
      _
    // Predicated region
    $region10: #{tpu_custom_call.1} parent=1 // pred_check
      _
    $region11: #{tpu_custom_call.1} parent=1 // pred_check_branch
      %36 = sbr.rel (0) target = $region13
    $region12: #{tpu_custom_call.1} parent=1 // pred_region
      _
    $region13: #{tpu_custom_call.1} parent=1 // pred_fallthru
      _
    // Predicated region
    $region14: #{tpu_custom_call.1} parent=1 // pred_check
      _
    $region15: #{tpu_custom_call.1} parent=1 // pred_check_branch
      %38 = sbr.rel (0) target = $region17
    $region16: #{tpu_custom_call.1} parent=1 // pred_region
      %39 = dma.done [#allocation4], 256
    $region17: #{tpu_custom_call.1} parent=1 // pred_fallthru
      _
    // Predicated region
    $region18: #{tpu_custom_call.1} parent=1 // pred_check
      _
    $region19: #{tpu_custom_call.1} parent=1 // pred_check_branch
      %41 = sbr.rel (0) target = $region21
    $region20: #{tpu_custom_call.1} parent=1 // pred_region
      %42 = dma.done [#allocation7], 2048
    $region21: #{tpu_custom_call.1} parent=1 // pred_fallthru
      _
    %p43 = scmp.eq.s32.totalorder 0, 0
    // Predicated region
    $region22: #{tpu_custom_call.1} parent=1 // pred_check
      %p44 = pneg %p43
    $region23: #{tpu_custom_call.1} parent=1 // pred_check_branch
      %46 = sbr.rel (%p44) target = $region25
    $region24: #{tpu_custom_call.1} parent=1 // pred_region
      %47 = vst [vmem:[#allocation2] sm:$0xff] 0.0
      %48 = vst [vmem:[#allocation2 + $0x8] sm:$0xff] 0.0
    $region25: #{tpu_custom_call.1} parent=1 // pred_fallthru
      _
    %v49 = vld [vmem:[#allocation2] sm:$0xff]
    %v50 = vld [vmem:[#allocation2 + $0x8] sm:$0xff]
    %v51 = vld [vmem:[#allocation3] sm:$0xff]
    %v52 = vld [vmem:[#allocation3 + $0x8] sm:$0xff]
    %v53 = vld [vmem:[#allocation6] sm:$0xff]
    %v54 = vld [vmem:[#allocation6 + $0x8] sm:$0xff]
    %v55 = vld [vmem:[#allocation6 + $0x10] sm:$0xff]
    %v56 = vld [vmem:[#allocation6 + $0x18] sm:$0xff]
    %v57 = vld [vmem:[#allocation6 + $0x20] sm:$0xff]
    %v58 = vld [vmem:[#allocation6 + $0x28] sm:$0xff]
    %v59 = vld [vmem:[#allocation6 + $0x30] sm:$0xff]
    %v60 = vld [vmem:[#allocation6 + $0x38] sm:$0xff]
    %v61 = vld [vmem:[#allocation6 + $0x40] sm:$0xff]
    %v62 = vld [vmem:[#allocation6 + $0x48] sm:$0xff]
    %v63 = vld [vmem:[#allocation6 + $0x50] sm:$0xff]
    %v64 = vld [vmem:[#allocation6 + $0x58] sm:$0xff]
    %v65 = vld [vmem:[#allocation6 + $0x60] sm:$0xff]
    %v66 = vld [vmem:[#allocation6 + $0x68] sm:$0xff]
    %v67 = vld [vmem:[#allocation6 + $0x70] sm:$0xff]
    %v68 = vld [vmem:[#allocation6 + $0x78] sm:$0xff]
    %69 = vmatprep.subr.mxu0 0.0
    %70 = vmatpush1.msra.mxu0 %v53
    %71 = vmatprep.subr.mxu0 0.0
    %72 = vmatpush1.msra.mxu0 %v54
    %73 = vmatprep.subr.mxu0 0.0
    %74 = vmatpush1.msra.mxu0 %v55
    %75 = vmatprep.subr.mxu0 0.0
    %76 = vmatpush1.msra.mxu0 %v56
    %77 = vmatprep.subr.mxu0 0.0
    %78 = vmatpush1.msra.mxu0 %v57
    %79 = vmatprep.subr.mxu0 0.0
    %80 = vmatpush1.msra.mxu0 %v58
    %81 = vmatprep.subr.mxu0 0.0
    %82 = vmatpush1.msra.mxu0 %v59
    %83 = vmatprep.subr.mxu0 0.0
    %84 = vmatpush1.msra.mxu0 %v60
    %85 = vmatprep.subr.mxu0 0.0
    %86 = vmatpush1.msra.mxu0 %v61
    %87 = vmatprep.subr.mxu0 0.0
    %88 = vmatpush1.msra.mxu0 %v62
    %89 = vmatprep.subr.mxu0 0.0
    %90 = vmatpush1.msra.mxu0 %v63
    %91 = vmatprep.subr.mxu0 0.0
    %92 = vmatpush1.msra.mxu0 %v64
    %93 = vmatprep.subr.mxu0 0.0
    %94 = vmatpush1.msra.mxu0 %v65
    %95 = vmatprep.subr.mxu0 0.0
    %96 = vmatpush1.msra.mxu0 %v66
    %97 = vmatprep.subr.mxu0 0.0
    %98 = vmatpush1.msra.mxu0 %v67
    %99 = vmatprep.subr.mxu0 0.0
    %100 = vmatpush1.msra.mxu0 %v68
    %101 = vmatprep.subr.mxu0 0.0
    %102 = vmatpush1.msra.mxu0 0.0
    %103 = vmatprep.subr.mxu0 0.0
    %104 = vmatpush1.msra.mxu0 0.0
    %105 = vmatprep.subr.mxu0 0.0
    %106 = vmatpush1.msra.mxu0 0.0
    %107 = vmatprep.subr.mxu0 0.0
    %108 = vmatpush1.msra.mxu0 0.0
    %109 = vmatprep.subr.mxu0 0.0
    %110 = vmatpush1.msra.mxu0 0.0
    %111 = vmatprep.subr.mxu0 0.0
    %112 = vmatpush1.msra.mxu0 0.0
    %113 = vmatprep.subr.mxu0 0.0
    %114 = vmatpush1.msra.mxu0 0.0
    %115 = vmatprep.subr.mxu0 0.0
    %116 = vmatpush1.msra.mxu0 0.0
    %117 = vmatprep.subr.mxu0 0.0
    %118 = vmatpush1.msra.mxu0 0.0
    %119 = vmatprep.subr.mxu0 0.0
    %120 = vmatpush1.msra.mxu0 0.0
    %121 = vmatprep.subr.mxu0 0.0
    %122 = vmatpush1.msra.mxu0 0.0
    %123 = vmatprep.subr.mxu0 0.0
    %124 = vmatpush1.msra.mxu0 0.0
    %125 = vmatprep.subr.mxu0 0.0
    %126 = vmatpush1.msra.mxu0 0.0
    %127 = vmatprep.subr.mxu0 0.0
    %128 = vmatpush1.msra.mxu0 0.0
    %129 = vmatprep.subr.mxu0 0.0
    %130 = vmatpush1.msra.mxu0 0.0
    %131 = vmatprep.subr.mxu0 0.0
    %132 = vmatpush1.msra.mxu0 0.0
    %133 = vmatprep.mubr.f32.mxu0 0.0
    %134 = vmatmul.mubr.f32.gmra.mrb[0].mxu0 %v51
    %v135 = vpop.f32.mrb[0].mxu0
    %v136 = vadd.f32 0.0, %v135
    %v137 = vpop.f32.mrb[0].mxu0
    %138 = vmatprep.mubr.f32.mxu0 0.0
    %139 = vmatmul.mubr.f32.gmra.mrb[0].mxu0 %v52
    %v140 = vpop.f32.mrb[0].mxu0
    %v141 = vadd.f32 0.0, %v140
    %v142 = vpop.f32.mrb[0].mxu0
    %143 = vdwg.mxu0
    %v144 = vadd.f32 %v49, %v136
    %v145 = vadd.f32 %v50, %v141
    %146 = vst [vmem:[#allocation2] sm:$0xff] %v144
    %147 = vst [vmem:[#allocation2 + $0x8] sm:$0xff] %v145
    // Predicated region
    $region26: #{tpu_custom_call.1} parent=1 // pred_check
      %p148 = pneg %p43
    $region27: #{tpu_custom_call.1} parent=1 // pred_check_branch
      %150 = sbr.rel (%p148) target = $region29
    $region28: #{tpu_custom_call.1} parent=1 // pred_region
      %v151 = vld [vmem:[#allocation2] sm:$0xff]
      %v152 = vld [vmem:[#allocation2 + $0x8] sm:$0xff]
      %v153 = vld [vmem:[%s2] sm:$0x1]
      %v155 = vlaneseq
      %v156 = vshrl.u32 %v155, 7
      %v157 = vsub.s32 0, %v156
      %v158 = vrot.slane %v153, %v157
      %v160 = vadd.f32 %v151, %v158
      %v161 = vadd.f32 %v152, %v158
      %162 = vst [vmem:[#allocation8] sm:$0xff] %v160
      %163 = vst [vmem:[#allocation8 + $0x8] sm:$0xff] %v161
    $region29: #{tpu_custom_call.1} parent=1 // pred_fallthru
      _
    // Predicated region
    $region30: #{tpu_custom_call.1} parent=1 // pred_check
      _
    $region31: #{tpu_custom_call.1} parent=1 // pred_check_branch
      %165 = sbr.rel (0) target = $region33
    $region32: #{tpu_custom_call.1} parent=1 // pred_region
      %s167 = ssub.s32 256, 256
      %168 = vsyncadd [#allocation5], %s167
      %s169 = sshll.u32 [#allocation8], 4
      %s170 = int_to_ptr.vmem [resolvable:$true] %s169
      %175 = dma.vmem_to_hbm [thread:$0]  %s170, 256, %s3, [#allocation5], 128, 128, 8
    $region33: #{tpu_custom_call.1} parent=1 // pred_fallthru
      _
    // Predicated region
    $region34: #{tpu_custom_call.1} parent=1 // pred_check
      _
    $region35: #{tpu_custom_call.1} parent=1 // pred_check_branch
      %177 = sbr.rel (0) target = $region37
    $region36: #{tpu_custom_call.1} parent=1 // pred_region
      %178 = dma.done [#allocation5], 256
    $region37: #{tpu_custom_call.1} parent=1 // pred_fallthru
      _
    %179 = vsyncpa [#allocation4], 1
    %180 = vsyncpa [#allocation7], 1
    %181 = vsyncpa [#allocation5], 1

</llo_original>
